<compile_context>
chip_gen: v5e
topology: v5e:2x2
jax: 0.10.0
libtpu: 0.0.40
codegen_flags: <defaults>
</compile_context>

<pallas_src>
import functools

import jax
import jax.numpy as jnp
from jax.experimental import pallas as pl
from jax.experimental.pallas import tpu as pltpu

F32 = jnp.float32
VMEM_SPEC = pl.BlockSpec(memory_space=pltpu.MemorySpace.VMEM)


# ----------------------------------------------------------------------------
# small in-kernel helpers
# ----------------------------------------------------------------------------
def _log_softmax(x):
    m = jnp.max(x, axis=-1, keepdims=True)
    s = x - m
    return s - jnp.log(jnp.sum(jnp.exp(s), axis=-1, keepdims=True))


def _argmax_lastaxis(x):
    """(N, K) -> (N, 1) int32 index of the (first) max along the last axis."""
    big = x.shape[-1]
    m = jnp.max(x, axis=-1, keepdims=True)
    iota = jax.lax.broadcasted_iota(jnp.int32, x.shape, x.ndim - 1)
    return jnp.min(jnp.where(x >= m, iota, big), axis=-1, keepdims=True)


def _spatial_tile(S, max_tile=2048):
    """Largest multiple of 128 that divides S (<= max_tile); else full S."""
    if S % 128 != 0:
        return S
    t = 128
    for cand in range(128, min(S, max_tile) + 1, 128):
        if S % cand == 0:
            t = cand
    return t


# ----------------------------------------------------------------------------
# Kernel 1: judge  (GAP + linear + argmax)   -- stand-in for pretrained CNN
# ----------------------------------------------------------------------------
def _judge_kernel(x_ref, wj_ref, bj_ref, jpred_ref):
    # TODO(synk): judge CNN backbone is external; synthesized as GAP + linear.
    x = x_ref[...]                                             # (B, C, S)
    pooled = jnp.mean(x, axis=-1)                              # (B, C)
    logits = jnp.dot(pooled, wj_ref[...], preferred_element_type=F32) + bj_ref[...]
    jpred_ref[...] = _argmax_lastaxis(logits)                  # argmax(softmax)==argmax(logits)


# ----------------------------------------------------------------------------
# Kernel 2: fext  (1x1-conv feature projection + nearest-neighbour VQ)
#   grid = (B, S // tS), both axes parallel, codebook resident.
# ----------------------------------------------------------------------------
def _fext_kernel(x_ref, wft_ref, bf_ref, cb_ref, cbt_ref, c2_ref,
                 z_ref, sym_ref, sse_ref):
    xb = x_ref[0]                                              # (C, tS)
    fb = jnp.dot(wft_ref[...], xb, preferred_element_type=F32) + bf_ref[...]   # (D, tS)
    cross = jnp.dot(cb_ref[...], fb, preferred_element_type=F32)               # (K, tS)
    f2 = jnp.sum(fb * fb, axis=0, keepdims=True)                               # (1, tS)
    d = f2 - 2.0 * cross + c2_ref[...]                                         # (K, tS)
    K = d.shape[0]
    dmin = jnp.min(d, axis=0, keepdims=True)
    kiota = jax.lax.broadcasted_iota(jnp.int32, d.shape, 0)
    idx = jnp.min(jnp.where(d <= dmin, kiota, K), axis=0, keepdims=True)       # (1, tS)
    onehot = (kiota == idx).astype(F32)                                        # (K, tS)
    zq = jnp.dot(cbt_ref[...], onehot, preferred_element_type=F32)             # (D, tS)
    z_ref[0] = zq
    sym_ref[0] = idx
    # TODO(synk): VectorQuantizer codebook/commitment loss weighting and the
    # straight-through estimator are external; per-block quantisation SSE only.
    sse_ref[...] = jnp.sum((zq - fb) ** 2) * jnp.ones(sse_ref.shape, F32)


# ----------------------------------------------------------------------------
# Kernel 3: mega debate kernel
#   quantized classifier + full T x nagents debate loop + per-agent losses.
# ----------------------------------------------------------------------------
def _debate_kernel(z_ref, jpred_ref, wq_ref, bq_ref,
                   wiz_ref, wig_ref, wic_ref, wio_ref, whh_ref, bh_ref,
                   wha_ref, ba_ref, wb_ref, bb_ref,
                   wcz_ref, wca_ref, wch_ref, bc_ref,
                   slab_ref, ascal_ref, sscal_ref,
                   *, nagents, T, A, Hd, n_class, contrastive):
    z = z_ref[...]                                             # (B, D)
    B = z.shape[0]
    jpred = jpred_ref[...]                                     # (B, 1) int32
    nc_iota = jax.lax.broadcasted_iota(jnp.int32, (B, n_class), 1)
    jp_onehot = (nc_iota == jpred).astype(F32)                 # (B, n_class)

    slab_ref[...] = jnp.zeros(slab_ref.shape, F32)
    TA = T * A

    # -------- quantized classifier (QClassifier stand-in: linear + log_softmax)
    cql = _log_softmax(jnp.dot(z, wq_ref[...], preferred_element_type=F32) + bq_ref[...])
    cq_pred = _argmax_lastaxis(cql)                            # (B, 1)
    cq_loss = -jnp.mean(jnp.sum(jp_onehot * cql, axis=-1))     # F.nll_loss vs jpred
    cq_acc = 100.0 * jnp.mean((cq_pred == jpred).astype(F32))
    # TODO(synk): quantized_optimizer / Adam update step is not reproduced.

    # -------- debate loop (state resident in VMEM/vregs for all T x nagents steps)
    a_iota = jax.lax.broadcasted_iota(jnp.int32, (B, A), 1)
    args_prev = [jnp.zeros((B, A), F32) for _ in range(nagents)]
    hs = [jnp.zeros((B, Hd), F32) for _ in range(nagents)]
    hist = jnp.zeros((B, A), F32)
    dists = [[None] * T for _ in range(nagents)]
    logpis = [[None] * T for _ in range(nagents)]
    bases = [[None] * T for _ in range(nagents)]
    argsum = [jnp.zeros((B, A), F32) for _ in range(nagents)]
    ent_sum = [0.0 for _ in range(nagents)]

    # TODO(synk): RecurrentAttentionAgent.forwardStep internals are external;
    # synthesized as tanh-RNN step -> categorical argument head (greedy pick),
    # baseline head.  (Greedy argmax instead of a categorical sample.)
    for t in range(T):
        args_const = list(args_prev)
        new_args = [None] * nagents
        for ai in range(nagents):
            cur = args_const[ai]
            opp = args_const[1 - ai]
            hist = ((hist + cur + opp) > 0).astype(F32)
            pre = (jnp.dot(z, wiz_ref[ai], preferred_element_type=F32)
                   + jnp.dot(hist, wig_ref[ai], preferred_element_type=F32)
                   + jnp.dot(cur, wic_ref[ai], preferred_element_type=F32)
                   + jnp.dot(opp, wio_ref[ai], preferred_element_type=F32)
                   + jnp.dot(hs[ai], whh_ref[ai], preferred_element_type=F32)
                   + bh_ref[ai])
            h_new = jnp.tanh(pre)                               # (B, Hd)
            logits = jnp.dot(h_new, wha_ref[ai], preferred_element_type=F32) + ba_ref[ai]
            logp = _log_softmax(logits)                         # (B, A)
            dist = jnp.exp(logp)                                # softmax via exp(log_softmax)
            idx = _argmax_lastaxis(logits)                      # (B, 1)
            onehot = (a_iota == idx).astype(F32)                # argument (one-hot)

            hs[ai] = h_new
            new_args[ai] = onehot
            if ai == 0:
                args_const[0] = onehot                          # reference updates agent-0 slot
            dists[ai][t] = dist
            logpis[ai][t] = jnp.sum(onehot * logp, axis=-1, keepdims=True)   # (B, 1)
            bases[ai][t] = jnp.dot(h_new, wb_ref[ai], preferred_element_type=F32) + bb_ref[ai]
            argsum[ai] = argsum[ai] + onehot
            ent_sum[ai] = ent_sum[ai] + jnp.sum(-dist * logp)

            # pack lane-dense slab: [0:TA)=arguments, [TA:2TA)=dists, [2TA]=claim
            slab_ref[ai, :, t * A:(t + 1) * A] = onehot
            slab_ref[ai, :, TA + t * A:TA + (t + 1) * A] = dist
        args_prev = new_args

    # -------- DDistance shared pieces (nagents == 2, as in the reference)
    invT = 1.0 / T
    dmean = []
    for aj in range(nagents):
        acc = dists[aj][0]
        for t in range(1, T):
            acc = acc + dists[aj][t]
        dmean.append(acc * invT)                                # (B, A)
    d0t = dmean[0] / jnp.sum(jnp.abs(dmean[0]))                 # global L1 norm (torch.norm(.,1))
    d1t = dmean[1] / jnp.sum(jnp.abs(dmean[1]))
    euclid = jnp.sum(jnp.abs(d0t - d1t))
    # TODO(synk): ContrastiveLossELI5 is external; mean row cosine similarity stand-in.
    num = jnp.sum(d0t * d1t, axis=-1)
    den = (jnp.sqrt(jnp.sum(d0t * d0t, axis=-1))
           * jnp.sqrt(jnp.sum(d1t * d1t, axis=-1)) + 1e-8)
    inter = euclid - jnp.mean(num / den)

    # -------- per-agent epilogue (classifier, NLL, reward, RL losses, regularizers)
    lane = jax.lax.broadcasted_iota(jnp.int32, (1, 128), 1)
    for ai in range(nagents):
        arg_pooled = jnp.clip(argsum[ai], 0.0, 1.0)             # (B, A)
        logits_c = (jnp.dot(z, wcz_ref[ai], preferred_element_type=F32)
                    + jnp.dot(arg_pooled, wca_ref[ai], preferred_element_type=F32)
                    + jnp.dot(hs[ai], wch_ref[ai], preferred_element_type=F32)
                    + bc_ref[ai])
        logp_agent = _log_softmax(logits_c)                     # (B, n_class)
        claim = _argmax_lastaxis(logp_agent)                    # (B, 1)
        if contrastive:
            loss_classifier = 0.0
        else:
            loss_classifier = -jnp.mean(jnp.sum(jp_onehot * logp_agent, axis=-1))

        # TODO(synk): reward_fns are injected externally (None in __init__);
        # agreement-with-judge reward stand-in.  (No stop_gradient: forward only.)
        reward = (claim == jpred).astype(F32)                   # (B, 1)
        lb = 0.0
        lr = 0.0
        for t in range(T):
            lb = lb + jnp.sum((bases[ai][t] - reward) ** 2)
            lr = lr + jnp.sum(-logpis[ai][t] * (reward - bases[ai][t]))
        loss_baseline = lb / (B * T)                            # == F.mse_loss(baselines, reward.repeat)
        loss_reinforce = lr / B                                 # mean over B of sum over T

        entropy = ent_sum[ai] / (B * T)                         # HLoss(args_dist)
        intra = 0.0
        for t in range(1, T):
            a0 = dists[ai][t - 1]
            a1 = dists[ai][t]
            cs = jnp.sum(a0 * a1, axis=-1) / (
                jnp.sqrt(jnp.sum(a0 * a0, axis=-1))
                * jnp.sqrt(jnp.sum(a1 * a1, axis=-1)) + 1e-8)
            intra = intra + jnp.mean(cs)
        intra = intra * invT

        reg = entropy + intra + (-inter if contrastive else inter)
        loss = loss_reinforce + loss_baseline + loss_classifier + 0.1 * reg
        acc = 100.0 * jnp.mean((claim == jpred).astype(F32))

        slab_ref[ai, :, 2 * TA:2 * TA + 1] = claim.astype(F32)
        ascal_ref[ai] = (loss * (lane == 0).astype(F32)
                         + acc * (lane == 1).astype(F32))

    blane = jax.lax.broadcasted_iota(jnp.int32, sscal_ref.shape, 1)
    sscal_ref[...] = (cq_pred.astype(F32) * (blane == 0).astype(F32)
                      + cq_loss * (blane == 1).astype(F32)
                      + cq_acc * (blane == 2).astype(F32))


# ----------------------------------------------------------------------------
# Debate model (Pallas)
# ----------------------------------------------------------------------------
class DebatePallas:
    def __init__(self, *, in_channels=4, n_class=8, modulated_channels=16,
                 n_codes=32, narguments=3, nagents=2, arg_dim=16, rnn_hidden=32,
                 contrastive=False, seed=0):
        assert nagents == 2, "DDistance (and the reference) assume two agents"
        self.C = in_channels
        self.n_class = n_class
        self.D = modulated_channels
        self.K = n_codes
        self.T = narguments
        self.nagents = nagents
        self.A = arg_dim
        self.Hd = rnn_hidden
        self.contrastive = contrastive

        key = jax.random.PRNGKey(seed)
        ks = iter(jax.random.split(key, 64))

        def init(shape, scale=0.1):
            return scale * jax.random.normal(next(ks), shape, F32)

        na, D, A, Hd, nc, C, K = nagents, self.D, self.A, self.Hd, n_class, self.C, self.K

        # judge (stand-in for external pretrained CNN): GAP + linear
        self.Wj = init((C, nc))
        self.bj = init((1, nc))
        # feature extractor (1x1 conv == per-pixel linear), stored transposed
        self.WfT = init((D, C))
        self.bf = init((D, 1))
        # VQ codebook (+ precomputed transposed copy and squared norms: hoisted)
        self.codebook = init((K, D), scale=1.0)
        self.codebookT = jnp.transpose(self.codebook)
        self.c2 = jnp.sum(self.codebook * self.codebook, axis=1, keepdims=True)
        # quantized classifier (QClassifier(modulated_channels, n_class))
        self.Wq = init((D, nc))
        self.bq = init((1, nc))
        # agents (weights stacked over agents, input matrices pre-split so the
        # kernel never needs in-kernel concatenation)
        self.wiz = init((na, D, Hd))    # z        -> hidden
        self.wig = init((na, A, Hd))    # history  -> hidden
        self.wic = init((na, A, Hd))    # own arg  -> hidden
        self.wio = init((na, A, Hd))    # opp arg  -> hidden
        self.whh = init((na, Hd, Hd))
        self.bh = init((na, 1, Hd))
        self.wha = init((na, Hd, A))
        self.ba = init((na, 1, A))
        self.wb = init((na, Hd, 1))
        self.bb = init((na, 1, 1))
        self.wcz = init((na, D, nc))    # agent.classifier(z, argument, h) split
        self.wca = init((na, A, nc))
        self.wch = init((na, Hd, nc))
        self.bc = init((na, 1, nc))

    # -------------------- forward (training path, supportive) --------------------
    def forward(self, x, y):
        B, C, H, W = x.shape
        S = H * W
        xr = x.reshape(B, C, S)                      # metadata-only reshape, no transpose

        # ---- kernel 1: judge ----
        jpred2 = pl.pallas_call(
            _judge_kernel,
            out_shape=jax.ShapeDtypeStruct((B, 1), jnp.int32),
            in_specs=[VMEM_SPEC, VMEM_SPEC, VMEM_SPEC],
            out_specs=VMEM_SPEC,
        )(xr, self.Wj, self.bj)

        # ---- kernel 2: fext (1x1 conv + VQ), gridded over (batch, spatial blocks) ----
        tS = _spatial_tile(S)
        nblk = S // tS
        D, K = self.D, self.K
        z_orig_f, sym, sse = pl.pallas_call(
            _fext_kernel,
            out_shape=(jax.ShapeDtypeStruct((B, D, S), F32),
                       jax.ShapeDtypeStruct((B, 1, S), jnp.int32),
                       jax.ShapeDtypeStruct((B, nblk, 8, 128), F32)),
            grid=(B, nblk),
            in_specs=[
                pl.BlockSpec((1, C, tS), lambda b, i: (b, 0, i)),
                pl.BlockSpec((D, C), lambda b, i: (0, 0)),
                pl.BlockSpec((D, 1), lambda b, i: (0, 0)),
                pl.BlockSpec((K, D), lambda b, i: (0, 0)),
                pl.BlockSpec((D, K), lambda b, i: (0, 0)),
                pl.BlockSpec((K, 1), lambda b, i: (0, 0)),
            ],
            out_specs=(
                pl.BlockSpec((1, D, tS), lambda b, i: (b, 0, i)),
                pl.BlockSpec((1, 1, tS), lambda b, i: (b, 0, i)),
                pl.BlockSpec((1, 1, 8, 128), lambda b, i: (b, i, 0, 0)),
            ),
            compiler_params=pltpu.CompilerParams(
                dimension_semantics=("parallel", "parallel"),
                vmem_limit_bytes=32 * 1024 * 1024),
        )(xr, self.WfT, self.bf, self.codebook, self.codebookT, self.c2)

        z = jnp.mean(z_orig_f, axis=-1)                          # GAP -> (B, D)
        qloss = jnp.sum(sse[:, :, 0, 0]) / (B * S * D)           # mean((zq - feat)^2)
        z_orig = z_orig_f.reshape(B, D, H, W)
        symbol_idxs = sym.reshape(B, H, W)

        # ---- kernel 3: mega debate kernel ----
        slab, ascal, sscal = pl.pallas_call(
            functools.partial(_debate_kernel, nagents=self.nagents, T=self.T,
                              A=self.A, Hd=self.Hd, n_class=self.n_class,
                              contrastive=self.contrastive),
            out_shape=(jax.ShapeDtypeStruct((self.nagents, B, 128), F32),
                       jax.ShapeDtypeStruct((self.nagents, 1, 128), F32),
                       jax.ShapeDtypeStruct((B, 128), F32)),
            in_specs=[VMEM_SPEC] * 18,
            out_specs=(VMEM_SPEC, VMEM_SPEC, VMEM_SPEC),
        )(z, jpred2, self.Wq, self.bq,
          self.wiz, self.wig, self.wic, self.wio, self.whh, self.bh,
          self.wha, self.ba, self.wb, self.bb,
          self.wcz, self.wca, self.wch, self.bc)

        # ---- unpack lane-dense slabs ----
        jpred = jpred2[:, 0]
        cq_preds = sscal[:, 0].astype(jnp.int32)
        cq_loss = sscal[0, 1]
        cq_acc = sscal[0, 2]
        TA = self.T * self.A

        logs = {}
        for ai in range(self.nagents):
            arguments = slab[ai, :, 0:TA].reshape(B, self.T, self.A)
            args_dist = slab[ai, :, TA:2 * TA].reshape(B, self.T, self.A)
            claims = slab[ai, :, 2 * TA].astype(jnp.int32)
            logs[ai] = dict(
                acc=ascal[ai, 0, 1],
                dacc=cq_acc,                    # dpred == cq_preds stand-in
                loss=ascal[ai, 0, 0],
                jpred=jpred,
                dpred=cq_preds,
                cqacc=cq_acc,
                cqloss=cq_loss + qloss,
                preds=claims,
                z_idx=symbol_idxs,
                argument_dist=args_dist,
                arguments=arguments,
                z=z_orig,
            )
        return logs


# ----------------------------------------------------------------------------
if __name__ == "__main__":
    key = jax.random.PRNGKey(0)
    kx, ky = jax.random.split(key)
    B, C, H, W = 2, 4, 16, 16
    x = jax.random.normal(kx, (B, C, H, W), F32)           # image (batch, ch, h, w)
    y = jax.random.randint(ky, (B, 8), 0, 100)              # word indices (batch, seq_len)

    model = DebatePallas(in_channels=C, n_class=8, modulated_channels=16,
                         n_codes=32, narguments=3, nagents=2,
                         arg_dim=16, rnn_hidden=32, contrastive=False)
    logs = model.forward(x, y)
    for ai in logs:
        jax.block_until_ready(logs[ai]["loss"])
        jax.block_until_ready(logs[ai]["preds"])
    print("KERNEL_OK")
</pallas_src>

<mosaic_0001>
module attributes {stable_mosaic.version = 11 : i64} {
  func.func @_judge_kernel(%arg0: memref<2x4x256xf32, #tpu.memory_space<vmem>>, %arg1: memref<4x8xf32, #tpu.memory_space<vmem>>, %arg2: memref<1x8xf32, #tpu.memory_space<vmem>>, %arg3: memref<2x1xi32, #tpu.memory_space<vmem>>) attributes {dimension_semantics = [], scalar_prefetch = 0 : i64, scratch_operands = 0 : i64, tpu.core_type = #tpu.core_type<tc>} {
    %c0 = arith.constant 0 : index
    %c0_0 = arith.constant 0 : index
    %c0_1 = arith.constant 0 : index
    %0 = vector.load %arg0[%c0, %c0_0, %c0_1] : memref<2x4x256xf32, #tpu.memory_space<vmem>>, vector<2x4x256xf32>
    %cst = arith.constant dense<0.000000e+00> : vector<2x4xf32>
    %1 = vector.multi_reduction <add>, %0, %cst [2] : vector<2x4x256xf32> to vector<2x4xf32>
    %cst_2 = arith.constant 2.560000e+02 : f32
    %2 = vector.broadcast %cst_2 : f32 to vector<2x4xf32>
    %3 = arith.divf %1, %2 : vector<2x4xf32>
    %c0_3 = arith.constant 0 : index
    %c0_4 = arith.constant 0 : index
    %4 = vector.load %arg1[%c0_3, %c0_4] : memref<4x8xf32, #tpu.memory_space<vmem>>, vector<4x8xf32>
    %cst_5 = arith.constant dense<0.000000e+00> : vector<2x8xf32>
    %5 = tpu.matmul %3, %4, %cst_5 {dimension_numbers = #tpu.dot_dimension_numbers<[1], [0], [0], [1], [0, 0, 1, 1], [], []>} : vector<2x4xf32>, vector<4x8xf32>, vector<2x8xf32> -> vector<2x8xf32>
    %c0_6 = arith.constant 0 : index
    %c0_7 = arith.constant 0 : index
    %6 = vector.load %arg2[%c0_6, %c0_7] : memref<1x8xf32, #tpu.memory_space<vmem>>, vector<1x8xf32>
    %7 = vector.broadcast %6 : vector<1x8xf32> to vector<2x8xf32>
    %8 = arith.addf %5, %7 : vector<2x8xf32>
    %cst_8 = arith.constant dense<0xFF800000> : vector<2xf32>
    %9 = vector.multi_reduction <maximumf>, %8, %cst_8 [1] : vector<2x8xf32> to vector<2xf32>
    %10 = vector.shape_cast %9 : vector<2xf32> to vector<2x1xf32>
    %11 = tpu.iota {dimensions = array<i32: 1>} : vector<2x8xi32>
    %12 = vector.broadcast %10 : vector<2x1xf32> to vector<2x8xf32>
    %13 = arith.cmpf oge, %8, %12 : vector<2x8xf32>
    %c8_i32 = arith.constant 8 : i32
    %14 = vector.broadcast %c8_i32 : i32 to vector<2x8xi32>
    %15 = arith.select %13, %11, %14 : vector<2x8xi1>, vector<2x8xi32>
    %cst_9 = arith.constant dense<2147483647> : vector<2xi32>
    %16 = vector.multi_reduction <minsi>, %15, %cst_9 [1] : vector<2x8xi32> to vector<2xi32>
    %17 = vector.shape_cast %16 : vector<2xi32> to vector<2x1xi32>
    %c0_10 = arith.constant 0 : index
    %c0_11 = arith.constant 0 : index
    %18 = vector.load %arg3[%c0_10, %c0_11] : memref<2x1xi32, #tpu.memory_space<vmem>>, vector<2x1xi32>
    tpu.vector_store %arg3[%c0_10, %c0_11], %17 {strides = array<i32>} : memref<2x1xi32, #tpu.memory_space<vmem>>, vector<2x1xi32>,
    return
  }
}

</mosaic_0001>

<llo_original>
// kernel: tpu_custom_call.1
$region0: #{tpu_custom_call.1}
  #allocation0 [shape = 'u32[]', space=smem, size = 0x4, offset = 0x4, fixed_abs, tag = 'smem constant byte address 0x4 - core index']
  #allocation1 [shape = 'u32[72,128]{1,0:T(1,128)}', space=vmem, size = 0x9000, scoped, tag = 'internal scratch']
  %s0 = inlined_call_operand.hbm [shape: f32[2,4,256], index: 0, kind: input, shape index: {}]
  %s1 = inlined_call_operand.hbm [shape: f32[4,8], index: 1, kind: input, shape index: {}]
  %s2 = inlined_call_operand.vmem [shape: f32[1,8], index: 2, kind: input, shape index: {}]
  %s3 = inlined_call_operand.vmem [shape: s32[2,1], index: 3, kind: output, shape index: {}]
  %s4 = sld [smem:[#allocation0]]
  $region30: #{tpu_custom_call.1} parent=0
    _
  %s6 = ssub.s32 1, %s4
  %s7 = scalar_select 0, %s6, %s4
  $region1: #{tpu_custom_call.1} parent=0
    #allocation2 [shape = 'u8[8192]{0}', space=vmem, size = 0x2000, scoped, tag = 'input window, operand 0, single buffered']
    #allocation3 [shape = 's32[1]{0}', space=sflag, size = 0x4, scoped, tag = 'scoped memory for tpu_custom_call.1']
    #allocation4 [shape = 'u8[2048]{0}', space=vmem, size = 0x800, scoped, tag = 'input window, operand 1, single buffered']
    #allocation5 [shape = 's32[1]{0}', space=sflag, size = 0x4, scoped, tag = 'scoped memory for tpu_custom_call.1']
    %8 = vsyncpa [#allocation3], 0
    %9 = vsyncpa [#allocation5], 0
    // Predicated region
    $region2: #{tpu_custom_call.1} parent=1 // pred_check
      _
    $region3: #{tpu_custom_call.1} parent=1 // pred_check_branch
      %11 = sbr.rel (0) target = $region5
    $region4: #{tpu_custom_call.1} parent=1 // pred_region
      %13 = vsyncadd [#allocation3], 0
      %s14 = sshll.u32 %s0, 4
      %s15 = int_to_ptr.hbm [resolvable:$true] %s14
      %s16 = sshll.u32 [#allocation2], 4
      %s17 = int_to_ptr.vmem [resolvable:$true] %s16
      %22 = dma.hbm_to_vmem [thread:$0]  %s15, 256, %s17, [#allocation3], 128, 128, 8
    $region5: #{tpu_custom_call.1} parent=1 // pred_fallthru
      _
    // Predicated region
    $region6: #{tpu_custom_call.1} parent=1 // pred_check
      _
    $region7: #{tpu_custom_call.1} parent=1 // pred_check_branch
      %24 = sbr.rel (0) target = $region9
    $region8: #{tpu_custom_call.1} parent=1 // pred_region
      %26 = vsyncadd [#allocation5], 0
      %s28 = sshll.u32 %s1, 4
      %s29 = int_to_ptr.hbm [resolvable:$true] %s28
      %s30 = sshll.u32 [#allocation4], 4
      %s31 = int_to_ptr.vmem [resolvable:$true] %s30
      %33 = dma.hbm_to_vmem [thread:$0]  %s29, 64, %s31, [#allocation5]
    $region9: #{tpu_custom_call.1} parent=1 // pred_fallthru
      _
    // Predicated region
    $region10: #{tpu_custom_call.1} parent=1 // pred_check
      _
    $region11: #{tpu_custom_call.1} parent=1 // pred_check_branch
      %35 = sbr.rel (0) target = $region13
    $region12: #{tpu_custom_call.1} parent=1 // pred_region
      _
    $region13: #{tpu_custom_call.1} parent=1 // pred_fallthru
      _
    // Predicated region
    $region14: #{tpu_custom_call.1} parent=1 // pred_check
      _
    $region15: #{tpu_custom_call.1} parent=1 // pred_check_branch
      %37 = sbr.rel (0) target = $region17
    $region16: #{tpu_custom_call.1} parent=1 // pred_region
      %39 = dma.done [#allocation3], 256
    $region17: #{tpu_custom_call.1} parent=1 // pred_fallthru
      _
    // Predicated region
    $region18: #{tpu_custom_call.1} parent=1 // pred_check
      _
    $region19: #{tpu_custom_call.1} parent=1 // pred_check_branch
      %41 = sbr.rel (0) target = $region21
    $region20: #{tpu_custom_call.1} parent=1 // pred_region
      %43 = dma.done [#allocation5], 64
    $region21: #{tpu_custom_call.1} parent=1 // pred_fallthru
      _
    %v44 = vld [vmem:[#allocation2] sm:$0xff]
    %v45 = vld [vmem:[#allocation2 + $0x8] sm:$0xff]
    %48 = vst [vmem:[#allocation1] ss:$2 sm:$0xff] %v44
    %v49 = vld.sshfl [vmem:[#allocation1] sm:$0xff pattern:$0x75316420]
    %v50 = vld.sshfl [vmem:[#allocation1 + $0x8] sm:$0xff pattern:$0x75316420]
    %s51 = scalar_lea.vmem [#allocation1], 16
    %52 = vst [vmem:[%s51] ss:$2 sm:$0xff] %v45
    %v53 = vld.sshfl [vmem:[#allocation1 + $0x10] sm:$0xff pattern:$0x75316420]
    %v54 = vld.sshfl [vmem:[#allocation1 + $0x18] sm:$0xff pattern:$0x75316420]
    %vm59 = vcmask 1043456
    %v60 = vsel %vm59, %v49, 0.0
    %v61 = vsel %vm59, %v50, 0.0
    %v62 = vadd.f32 %v60, %v61
    %63 = vadd.xlane.f32.xlu0 %v62
    %v64 = vpop.xlane.xlu0 %63
    %v65 = vsel %vm59, %v53, 0.0
    %v66 = vsel %vm59, %v54, 0.0
    %v67 = vadd.f32 %v65, %v66
    %68 = vadd.xlane.f32.xlu0 %v67
    %v69 = vpop.xlane.xlu0 %68
    %v70 = vrcp.pop 256.0
    %v71 = vmul.f32 256.0, %v70
    %v72 = vsub.f32 1.0, %v71
    %v73 = vmul.f32 %v70, %v72
    %v74 = vadd.f32 %v70, %v73
    %vm75 = vweird.f32 %v70
    %v76 = vsel %vm75, %v70, %v74
    %v77 = vmul.f32 %v64, %v76
    %v78 = vmul.f32 %v69, %v76
    %v79 = vld [vmem:[#allocation4] sm:$0xf]
    %v80 = vld [vmem:[%s2] sm:$0x1]
    %v82 = vperm.slane %v80, 0
    %v86 = vlaneseq
    %v87 = vand.u32 %v86, 127
    %v88 = vperm.slane %v77, %v87
    %v89 = vperm.slane %v78, %v87
    %vm90 = vcmask 1041409
    %v91 = vsel %vm90, %v89, %v88
    %vm92 = vcmask 31744
    %v93 = vsel %vm92, %v91, 0
    %v96 = vsel %vm59, %v79, 0
    %98 = vmatpush.msra.mxu0 0.0
    %99 = vmatpush.msra.mxu0 0.0
    %100 = vmatpush.msra.mxu0 0.0
    %101 = vmatpush.msra.mxu0 0.0
    %102 = vmatpush.msra.mxu0 0.0
    %103 = vmatpush.msra.mxu0 0.0
    %104 = vmatpush.msra.mxu0 0.0
    %105 = vmatpush.msra.mxu0 0.0
    %106 = vmatpush.msra.mxu0 0.0
    %107 = vmatpush.msra.mxu0 0.0
    %108 = vmatpush.msra.mxu0 0.0
    %109 = vmatpush.msra.mxu0 0.0
    %110 = vmatpush.msra.mxu0 0.0
    %111 = vmatpush.msra.mxu0 0.0
    %112 = vmatpush.msra.mxu0 0.0
    %113 = vmatpush.msra.mxu0 %v96
    %114 = vmatmul.f32.gmra.mxu0 %v93
    %v115 = vpop.f32.mrf.mxu0
    %v116 = vadd.f32 %v82, %v115
    %117 = vdwg.mxu0
    %vm118 = vcmask 58368
    %v119 = vsel %vm118, %v116, -inf
    %120 = vmax.xlane.f32.xlu0 %v119
    %v121 = vpop.xlane.xlu0 %120
    %vm122 = vcmp.ge.f32.partialorder %v116, %v121
    %v123 = vsel %vm122, %v87, 8
    %v124 = vsel %vm118, %v123, 2147483647
    %v125 = vand.u32 %v124, 65535
    %v126 = vshra.s32 %v124, 16
    %v127 = vcvt.s32.f32 %v125
    %v128 = vcvt.s32.f32 %v126
    %129 = vmin.xlane.f32.xlu0 %v128
    %v130 = vpop.xlane.xlu0 %129
    %vm131 = vcmp.eq.f32.partialorder %v128, %v130
    %v132 = vsel %vm131, %v127, inf
    %133 = vmin.xlane.f32.xlu0 %v132
    %v134 = vpop.xlane.xlu0 %133
    %v135 = vcvt.f32.s32 %v134
    %v136 = vcvt.f32.s32 %v130
    %v137 = vshll.u32 %v136, 16
    %v138 = vadd.s32 %v137, %v135
    %vm139 = vcmask 1024
    %140 = vst.msk [vmem:[%s3] sm:$0x3] %vm139, %v138
    // Predicated region
    $region22: #{tpu_custom_call.1} parent=1 // pred_check
      _
    $region23: #{tpu_custom_call.1} parent=1 // pred_check_branch
      %142 = sbr.rel (0) target = $region25
    $region24: #{tpu_custom_call.1} parent=1 // pred_region
      _
    $region25: #{tpu_custom_call.1} parent=1 // pred_fallthru
      _
    // Predicated region
    $region26: #{tpu_custom_call.1} parent=1 // pred_check
      _
    $region27: #{tpu_custom_call.1} parent=1 // pred_check_branch
      %144 = sbr.rel (0) target = $region29
    $region28: #{tpu_custom_call.1} parent=1 // pred_region
      _
    $region29: #{tpu_custom_call.1} parent=1 // pred_fallthru
      _
    %145 = vsyncpa [#allocation3], 1
    %146 = vsyncpa [#allocation5], 1

</llo_original>
